<compile_context>
chip_gen: v5e
topology: v5e:2x2
jax: 0.10.0
libtpu: 0.0.40
codegen_flags: <defaults>
</compile_context>

<pallas_src>
import functools

import jax
import jax.numpy as jnp
from jax.experimental import pallas as pl
from jax.experimental.pallas import tpu as pltpu


def _round_up(x, m):
    return ((x + m - 1) // m) * m


def prob_rho_kernel(*refs, d_pad, use_dropout, training):
    """One token tile of the fused MLP2 + reparameterize hot path."""
    x_ref, w1_ref, b1_ref, w2_ref, b2_ref = refs[:5]
    out_ref = refs[-1]
    idx = 5
    mask_ref = None
    eps_ref = None
    if use_dropout:
        mask_ref = refs[idx]
        idx += 1
    if training:
        eps_ref = refs[idx]
        idx += 1

    # fc1 (bf16 MXU, f32 accumulate) + bias + ReLU (use_selu=False)
    h = jnp.dot(x_ref[...], w1_ref[...], preferred_element_type=jnp.float32)
    h = jnp.maximum(h + b1_ref[...], 0.0)

    # Dropout: pre-scaled mask (0 or 1/keep_prob), streamed in as bf16.
    if mask_ref is not None:
        h = h * mask_ref[...].astype(jnp.float32)

    # Fused fc21|fc22: one (Hp, 2*Dp) matmul; mu | logvar split at lane-aligned Dp.
    y = jnp.dot(h.astype(w2_ref.dtype), w2_ref[...],
                preferred_element_type=jnp.float32) + b2_ref[...]
    mu = y[:, :d_pad]

    if training:
        # Reparameterize: z = eps * exp(0.5*logvar) + mu   (f32 epilogue; v5e-safe)
        logvar = y[:, d_pad:]
        z = eps_ref[...].astype(jnp.float32) * jnp.exp(0.5 * logvar) + mu
    else:
        z = mu

    # NOTE: out stays f32 to match the reference dtype; switching out_shape to
    # bf16 here halves output HBM traffic if the consumer tolerates it.
    out_ref[...] = z.astype(out_ref.dtype)


def prob_rho_mlp(xp, w1, b1, w21, b21, w22, b22, *, dropout_p, training, rng_key):
    """xp: (N, Dinp) lane-padded bf16 token features -> (N, Drho) f32 rho."""
    N, Dinp = xp.shape
    Din, H = w1.shape
    Drho = w21.shape[1]

    # Lane-dense padded feature dims (multiples of the 128-lane vreg width).
    Hp = _round_up(H, 128)
    Dp = _round_up(Drho, 128)

    # Token tile: big (mem/step-overhead bound kernel), multiple of 16 sublanes,
    # backed off so large N keeps >= 4 grid steps for megacore load balance.
    TM = min(2048, _round_up(N, 16))
    while TM > 256 and _round_up(N, TM) // TM < 4:
        TM //= 2
    Np = _round_up(N, TM)
    if Np != N:
        xp = jnp.pad(xp, ((0, Np - N), (0, 0)))

    # Zero-pad weights once; fuse fc21|fc22 into one weight / bias.
    w1p = jnp.zeros((Dinp, Hp), jnp.bfloat16).at[:Din, :H].set(w1.astype(jnp.bfloat16))
    b1p = jnp.zeros((1, Hp), jnp.float32).at[:, :H].set(b1.reshape(1, H))
    w2p = (jnp.zeros((Hp, 2 * Dp), jnp.bfloat16)
           .at[:H, :Drho].set(w21.astype(jnp.bfloat16))
           .at[:H, Dp:Dp + Drho].set(w22.astype(jnp.bfloat16)))
    b2p = (jnp.zeros((1, 2 * Dp), jnp.float32)
           .at[:, :Drho].set(b21.reshape(1, Drho))
           .at[:, Dp:Dp + Drho].set(b22.reshape(1, Drho)))

    use_dropout = bool(training) and float(dropout_p) > 0.0

    inputs = [xp, w1p, b1p, w2p, b2p]
    in_specs = [
        pl.BlockSpec((TM, Dinp), lambda i: (i, 0)),     # x tile (streamed)
        pl.BlockSpec((Dinp, Hp), lambda i: (0, 0)),     # W1 (resident)
        pl.BlockSpec((1, Hp), lambda i: (0, 0)),        # b1
        pl.BlockSpec((Hp, 2 * Dp), lambda i: (0, 0)),   # W21|W22 fused
        pl.BlockSpec((1, 2 * Dp), lambda i: (0, 0)),    # b21|b22 fused
    ]
    # TODO(synk): pipeline_mode=pl.Buffered(1) on the resident weight specs would
    # drop their second VMEM buffer on v7x; left at default for portability.

    key_mask, key_eps = jax.random.split(rng_key)
    if use_dropout:
        keep = 1.0 - float(dropout_p)
        mask = ((jax.random.uniform(key_mask, (Np, Hp), jnp.float32) < keep)
                .astype(jnp.bfloat16) * jnp.bfloat16(1.0 / keep))
        inputs.append(mask)
        in_specs.append(pl.BlockSpec((TM, Hp), lambda i: (i, 0)))
    if training:
        eps = jax.random.normal(key_eps, (Np, Dp), jnp.bfloat16)
        inputs.append(eps)
        in_specs.append(pl.BlockSpec((TM, Dp), lambda i: (i, 0)))

    out_specs = pl.BlockSpec((TM, Dp), lambda i: (i, 0))

    kernel = functools.partial(prob_rho_kernel, d_pad=Dp,
                               use_dropout=use_dropout, training=bool(training))

    # VMEM budget: 2x (double-buffered) streamed tiles + 2x resident weights
    # (default buffering), plus headroom.
    weight_bytes = Dinp * Hp * 2 + Hp * 2 * Dp * 2 + Hp * 4 + 2 * Dp * 4
    stream_bytes = TM * Dinp * 2 + TM * Dp * 4
    if use_dropout:
        stream_bytes += TM * Hp * 2
    if training:
        stream_bytes += TM * Dp * 2
    vmem_limit = int(min(max(2 * weight_bytes + 2 * stream_bytes + (2 << 20),
                             8 << 20), 64 << 20))

    bytes_accessed = Np * Dinp * 2 + Np * Dp * 4 + weight_bytes
    if use_dropout:
        bytes_accessed += Np * Hp * 2
    if training:
        bytes_accessed += Np * Dp * 2
    cost = pl.CostEstimate(
        flops=2 * Np * (Dinp * Hp + Hp * 2 * Dp),
        transcendentals=(Np * Dp) if training else 0,
        bytes_accessed=bytes_accessed,
    )

    zp = pl.pallas_call(
        kernel,
        out_shape=jax.ShapeDtypeStruct((Np, Dp), jnp.float32),
        grid=(Np // TM,),
        in_specs=in_specs,
        out_specs=out_specs,
        compiler_params=pltpu.CompilerParams(
            dimension_semantics=("parallel",),
            vmem_limit_bytes=vmem_limit,
        ),
        cost_estimate=cost,
    )(*inputs)

    # TODO(synk): the (N, Drho) slice is one extra output-sized HBM pass; a fused
    # consumer could read the padded (Np, Dp) slab directly and mask padded lanes.
    return zp[:N, :Drho]


def prob_rho_forward(roads, dict_u_arr, dict_s1_arr, emb_u, emb_s1,
                     w1, b1, w21, b21, w22, b22, *, dropout_p, training, rng_key):
    """roads: (B, S, 1) int32 road ids -> (B, S, dim_rho) sampled rho."""
    B, S, _ = roads.shape
    dim_u = emb_u.shape[1]
    dim_s1 = emb_s1.shape[1]
    Din = dim_u + dim_s1
    Dinp = _round_up(Din, 128)
    dim_rho = w21.shape[1]

    # Pad the (tiny) embedding tables once and store bf16, so the gather+concat
    # directly produces the lane-dense (N, Dinp) bf16 slab the kernel streams —
    # no separate pad/cast pass over the activation slab.  Layout stays
    # [u | s1 | zeros], matching W1's zero-padded rows.
    emb_u_b = emb_u.astype(jnp.bfloat16)
    emb_s1_b = (jnp.zeros((emb_s1.shape[0], Dinp - dim_u), jnp.bfloat16)
                .at[:, :dim_s1].set(emb_s1.astype(jnp.bfloat16)))

    # roads2u / roads_s_i dict lookups + embedding gathers (glue, kept in XLA)
    u = emb_u_b[dict_u_arr[roads]]       # (B, S, 1, dim_u)
    s1 = emb_s1_b[dict_s1_arr[roads]]    # (B, S, 1, Dinp - dim_u)
    x = jnp.concatenate([u, s1], axis=3)      # cat on dim 3
    x = jnp.squeeze(x, axis=2)                # (B, S, Dinp)
    xf = x.reshape(B * S, Dinp)

    z = prob_rho_mlp(xf, w1, b1, w21, b21, w22, b22,
                     dropout_p=dropout_p, training=training, rng_key=rng_key)
    return z.reshape(B, S, dim_rho)


if __name__ == "__main__":
    key = jax.random.PRNGKey(0)
    keys = jax.random.split(key, 13)

    # small synthetic config consistent with the module
    B, S = 2, 8
    num_roads = 32
    num_u, dim_u = 20, 16
    num_s1, dim_s1 = 14, 16
    hidden_size = 32
    dim_rho = 16
    dropout_p = 0.1
    Din = dim_u + dim_s1

    # dict_u / dict_s1 as dense lookup tables (road id -> feature id)
    dict_u_arr = jax.random.randint(keys[0], (num_roads,), 0, num_u, jnp.int32)
    dict_s1_arr = jax.random.randint(keys[1], (num_roads,), 0, num_s1, jnp.int32)

    # deterministic parameters
    emb_u = 0.1 * jax.random.normal(keys[2], (num_u, dim_u), jnp.float32)
    emb_s1 = 0.1 * jax.random.normal(keys[3], (num_s1, dim_s1), jnp.float32)
    w1 = 0.1 * jax.random.normal(keys[4], (Din, hidden_size), jnp.float32)
    b1 = 0.1 * jax.random.normal(keys[5], (1, hidden_size), jnp.float32)
    w21 = 0.1 * jax.random.normal(keys[6], (hidden_size, dim_rho), jnp.float32)
    b21 = 0.1 * jax.random.normal(keys[7], (1, dim_rho), jnp.float32)
    w22 = 0.1 * jax.random.normal(keys[8], (hidden_size, dim_rho), jnp.float32)
    b22 = 0.1 * jax.random.normal(keys[9], (1, dim_rho), jnp.float32)

    # inputs: (batch, seq, 1) road ids, matching the cat(dim=3)/squeeze(dim=2) usage
    roads = jax.random.randint(keys[10], (B, S, 1), 0, num_roads, jnp.int32)

    # training-mode stochastic tensors (dropout mask, reparam eps) are drawn with
    # jax.random in the wrapper and streamed through the kernel.  RNG stream
    # differs from torch.randn_like / nn.Dropout; semantics are identical.
    rng_key = keys[11]

    # TODO(synk): roads_length() (lengths gather * ratios) is not used in forward(); omitted.
    # TODO(synk): use_selu=True branch (F.selu) not implemented; module default path is ReLU.

    out = prob_rho_forward(roads, dict_u_arr, dict_s1_arr, emb_u, emb_s1,
                           w1, b1, w21, b21, w22, b22,
                           dropout_p=dropout_p, training=True, rng_key=rng_key)
    jax.block_until_ready(out)
    assert out.shape == (B, S, dim_rho) and out.dtype == jnp.float32
    assert bool(jnp.all(jnp.isfinite(out)))
    print("KERNEL_OK")
</pallas_src>

<mosaic_0001>
module attributes {stable_mosaic.version = 11 : i64} {
  func.func @prob_rho_kernel(%arg0: i32, %arg1: memref<16x128xbf16, #tpu.memory_space<vmem>>, %arg2: memref<128x128xbf16, #tpu.memory_space<vmem>>, %arg3: memref<1x128xf32, #tpu.memory_space<vmem>>, %arg4: memref<128x256xbf16, #tpu.memory_space<vmem>>, %arg5: memref<1x256xf32, #tpu.memory_space<vmem>>, %arg6: memref<16x128xbf16, #tpu.memory_space<vmem>>, %arg7: memref<16x128xbf16, #tpu.memory_space<vmem>>, %arg8: memref<16x128xf32, #tpu.memory_space<vmem>>) attributes {dimension_semantics = [#tpu.dimension_semantics<parallel>], iteration_bounds = array<i64: 1>, scalar_prefetch = 0 : i64, scratch_operands = 0 : i64, tpu.core_type = #tpu.core_type<tc>, window_params = [{transform_indices = @transform_0, window_bounds = array<i64: 16, 128>}, {pipeline_mode = #tpu.pipeline_mode<synchronous>, transform_indices = @transform_1, window_bounds = array<i64: 128, 128>}, {pipeline_mode = #tpu.pipeline_mode<synchronous>, transform_indices = @transform_2, window_bounds = array<i64: 1, 128>}, {pipeline_mode = #tpu.pipeline_mode<synchronous>, transform_indices = @transform_3, window_bounds = array<i64: 128, 256>}, {pipeline_mode = #tpu.pipeline_mode<synchronous>, transform_indices = @transform_4, window_bounds = array<i64: 1, 256>}, {transform_indices = @transform_5, window_bounds = array<i64: 16, 128>}, {transform_indices = @transform_6, window_bounds = array<i64: 16, 128>}, {transform_indices = @transform_7, window_bounds = array<i64: 16, 128>}]} {
    %c0 = arith.constant 0 : index
    %c0_0 = arith.constant 0 : index
    %0 = vector.load %arg1[%c0, %c0_0] : memref<16x128xbf16, #tpu.memory_space<vmem>>, vector<16x128xbf16>
    %c0_1 = arith.constant 0 : index
    %c0_2 = arith.constant 0 : index
    %1 = vector.load %arg2[%c0_1, %c0_2] : memref<128x128xbf16, #tpu.memory_space<vmem>>, vector<128x128xbf16>
    %cst = arith.constant dense<0.000000e+00> : vector<16x128xf32>
    %2 = tpu.matmul %0, %1, %cst {dimension_numbers = #tpu.dot_dimension_numbers<[1], [0], [0], [1], [0, 0, 1, 1], [], []>} : vector<16x128xbf16>, vector<128x128xbf16>, vector<16x128xf32> -> vector<16x128xf32>
    %c0_3 = arith.constant 0 : index
    %c0_4 = arith.constant 0 : index
    %3 = vector.load %arg3[%c0_3, %c0_4] : memref<1x128xf32, #tpu.memory_space<vmem>>, vector<1x128xf32>
    %4 = vector.broadcast %3 : vector<1x128xf32> to vector<16x128xf32>
    %5 = arith.addf %2, %4 : vector<16x128xf32>
    %cst_5 = arith.constant 0.000000e+00 : f32
    %6 = vector.broadcast %cst_5 : f32 to vector<16x128xf32>
    %7 = arith.maximumf %5, %6 : vector<16x128xf32>
    %c0_6 = arith.constant 0 : index
    %c0_7 = arith.constant 0 : index
    %8 = vector.load %arg6[%c0_6, %c0_7] : memref<16x128xbf16, #tpu.memory_space<vmem>>, vector<16x128xbf16>
    %9 = arith.extf %8 : vector<16x128xbf16> to vector<16x128xf32>
    %10 = arith.mulf %7, %9 : vector<16x128xf32>
    %11 = arith.truncf %10 : vector<16x128xf32> to vector<16x128xbf16>
    %c0_8 = arith.constant 0 : index
    %c0_9 = arith.constant 0 : index
    %12 = vector.load %arg4[%c0_8, %c0_9] : memref<128x256xbf16, #tpu.memory_space<vmem>>, vector<128x256xbf16>
    %cst_10 = arith.constant dense<0.000000e+00> : vector<16x256xf32>
    %13 = tpu.matmul %11, %12, %cst_10 {dimension_numbers = #tpu.dot_dimension_numbers<[1], [0], [0], [1], [0, 0, 1, 1], [], []>} : vector<16x128xbf16>, vector<128x256xbf16>, vector<16x256xf32> -> vector<16x256xf32>
    %c0_11 = arith.constant 0 : index
    %c0_12 = arith.constant 0 : index
    %14 = vector.load %arg5[%c0_11, %c0_12] : memref<1x256xf32, #tpu.memory_space<vmem>>, vector<1x256xf32>
    %15 = vector.broadcast %14 : vector<1x256xf32> to vector<16x256xf32>
    %16 = arith.addf %13, %15 : vector<16x256xf32>
    %17 = vector.extract_strided_slice %16 {offsets = [0, 0], sizes = [16, 128], strides = [1, 1]} : vector<16x256xf32> to vector<16x128xf32>
    %18 = vector.extract_strided_slice %16 {offsets = [0, 128], sizes = [16, 128], strides = [1, 1]} : vector<16x256xf32> to vector<16x128xf32>
    %c0_13 = arith.constant 0 : index
    %c0_14 = arith.constant 0 : index
    %19 = vector.load %arg7[%c0_13, %c0_14] : memref<16x128xbf16, #tpu.memory_space<vmem>>, vector<16x128xbf16>
    %20 = arith.extf %19 : vector<16x128xbf16> to vector<16x128xf32>
    %cst_15 = arith.constant 5.000000e-01 : f32
    %21 = vector.broadcast %cst_15 : f32 to vector<16x128xf32>
    %22 = arith.mulf %21, %18 : vector<16x128xf32>
    %23 = math.exp %22 : vector<16x128xf32>
    %24 = arith.mulf %20, %23 : vector<16x128xf32>
    %25 = arith.addf %24, %17 : vector<16x128xf32>
    %c0_16 = arith.constant 0 : index
    %c0_17 = arith.constant 0 : index
    %26 = vector.load %arg8[%c0_16, %c0_17] : memref<16x128xf32, #tpu.memory_space<vmem>>, vector<16x128xf32>
    tpu.vector_store %arg8[%c0_16, %c0_17], %25 {strides = array<i32>} : memref<16x128xf32, #tpu.memory_space<vmem>>, vector<16x128xf32>,
    return
  }
  func.func @transform_0(%arg0: i32) -> (i32, i32) {
    %c0_i32 = arith.constant 0 : i32
    %c0_i32_0 = arith.constant 0 : i32
    return %arg0, %c0_i32 : i32, i32
  }
  func.func @transform_1(%arg0: i32) -> (i32, i32) {
    %c0_i32 = arith.constant 0 : i32
    %c0_i32_0 = arith.constant 0 : i32
    %c0_i32_1 = arith.constant 0 : i32
    return %c0_i32, %c0_i32_0 : i32, i32
  }
  func.func @transform_2(%arg0: i32) -> (i32, i32) {
    %c0_i32 = arith.constant 0 : i32
    %c0_i32_0 = arith.constant 0 : i32
    %c0_i32_1 = arith.constant 0 : i32
    return %c0_i32, %c0_i32_0 : i32, i32
  }
  func.func @transform_3(%arg0: i32) -> (i32, i32) {
    %c0_i32 = arith.constant 0 : i32
    %c0_i32_0 = arith.constant 0 : i32
    %c0_i32_1 = arith.constant 0 : i32
    return %c0_i32, %c0_i32_0 : i32, i32
  }
  func.func @transform_4(%arg0: i32) -> (i32, i32) {
    %c0_i32 = arith.constant 0 : i32
    %c0_i32_0 = arith.constant 0 : i32
    %c0_i32_1 = arith.constant 0 : i32
    return %c0_i32, %c0_i32_0 : i32, i32
  }
  func.func @transform_5(%arg0: i32) -> (i32, i32) {
    %c0_i32 = arith.constant 0 : i32
    %c0_i32_0 = arith.constant 0 : i32
    return %arg0, %c0_i32 : i32, i32
  }
  func.func @transform_6(%arg0: i32) -> (i32, i32) {
    %c0_i32 = arith.constant 0 : i32
    %c0_i32_0 = arith.constant 0 : i32
    return %arg0, %c0_i32 : i32, i32
  }
  func.func @transform_7(%arg0: i32) -> (i32, i32) {
    %c0_i32 = arith.constant 0 : i32
    %c0_i32_0 = arith.constant 0 : i32
    return %arg0, %c0_i32 : i32, i32
  }
}

</mosaic_0001>

<llo_original>
// kernel: tpu_custom_call.1
$region0: #{tpu_custom_call.1}
  #allocation0 [shape = 'u32[]', space=smem, size = 0x4, offset = 0x4, fixed_abs, tag = 'smem constant byte address 0x4 - core index']
  #allocation1 [shape = 'u32[72,128]{1,0:T(1,128)}', space=vmem, size = 0x9000, scoped, tag = 'internal scratch']
  %s0 = inlined_call_operand.hbm [shape: bf16[16,128], index: 0, kind: input, shape index: {}]
  %s1 = inlined_call_operand.hbm [shape: bf16[128,128], index: 1, kind: input, shape index: {}]
  %s2 = inlined_call_operand.vmem [shape: f32[1,128], index: 2, kind: input, shape index: {}]
  %s3 = inlined_call_operand.hbm [shape: bf16[128,256], index: 3, kind: input, shape index: {}]
  %s4 = inlined_call_operand.vmem [shape: f32[1,256], index: 4, kind: input, shape index: {}]
  %s5 = inlined_call_operand.hbm [shape: bf16[16,128], index: 5, kind: input, shape index: {}]
  %s6 = inlined_call_operand.hbm [shape: bf16[16,128], index: 6, kind: input, shape index: {}]
  %s7 = inlined_call_operand.hbm [shape: f32[16,128], index: 7, kind: output, shape index: {}]
  %s8 = sld [smem:[#allocation0]]
  $region58: #{tpu_custom_call.1} parent=0
    _
  %s10 = ssub.s32 1, %s8
  %s11 = scalar_select 0, %s10, %s8
  $region1: #{tpu_custom_call.1} parent=0
    #allocation2 [shape = 'u8[4096]{0}', space=vmem, size = 0x1000, scoped, tag = 'input window, operand 0, single buffered']
    #allocation3 [shape = 's32[1]{0}', space=sflag, size = 0x4, scoped, tag = 'scoped memory for tpu_custom_call.1']
    #allocation4 [shape = 's32[1]{0}', space=sflag, size = 0x4, scoped, tag = 'scoped memory for tpu_custom_call.1']
    #allocation5 [shape = 'u8[32768]{0}', space=vmem, size = 0x8000, scoped, tag = 'input window, operand 1, single buffered']
    #allocation6 [shape = 's32[1]{0}', space=sflag, size = 0x4, scoped, tag = 'scoped memory for tpu_custom_call.1']
    #allocation7 [shape = 'u8[65536]{0}', space=vmem, size = 0x10000, scoped, tag = 'input window, operand 3, single buffered']
    #allocation8 [shape = 'u8[4096]{0}', space=vmem, size = 0x1000, scoped, tag = 'input window, operand 5, single buffered']
    #allocation9 [shape = 's32[1]{0}', space=sflag, size = 0x4, scoped, tag = 'scoped memory for tpu_custom_call.1']
    #allocation10 [shape = 'u8[4096]{0}', space=vmem, size = 0x1000, scoped, tag = 'input window, operand 6, single buffered']
    #allocation11 [shape = 'u8[8192]{0}', space=vmem, size = 0x2000, scoped, tag = 'output window, operand 0, single buffered']
    %12 = vsyncpa [#allocation3], 0
    %13 = vsyncpa [#allocation6], 0
    %14 = vsyncpa [#allocation9], 0
    %15 = vsyncpa [#allocation4], 0
    // Predicated region
    $region2: #{tpu_custom_call.1} parent=1 // pred_check
      _
    $region3: #{tpu_custom_call.1} parent=1 // pred_check_branch
      %17 = sbr.rel (0) target = $region5
    $region4: #{tpu_custom_call.1} parent=1 // pred_region
      %19 = vsyncadd [#allocation3], 0
      %s20 = sshll.u32 %s0, 4
      %s21 = int_to_ptr.hbm [resolvable:$true] %s20
      %s22 = sshll.u32 [#allocation2], 4
      %s23 = int_to_ptr.vmem [resolvable:$true] %s22
      %28 = dma.hbm_to_vmem [thread:$0]  %s21, 128, %s23, [#allocation3], 64, 64, 4
    $region5: #{tpu_custom_call.1} parent=1 // pred_fallthru
      _
    // Predicated region
    $region6: #{tpu_custom_call.1} parent=1 // pred_check
      _
    $region7: #{tpu_custom_call.1} parent=1 // pred_check_branch
      %30 = sbr.rel (0) target = $region9
    $region8: #{tpu_custom_call.1} parent=1 // pred_region
      %32 = vsyncadd [#allocation6], 0
      %s33 = sshll.u32 %s1, 4
      %s34 = int_to_ptr.hbm [resolvable:$true] %s33
      %s35 = sshll.u32 [#allocation5], 4
      %s36 = int_to_ptr.vmem [resolvable:$true] %s35
      %41 = dma.hbm_to_vmem [thread:$0]  %s34, 1024, %s36, [#allocation6], 64, 64, 4
    $region9: #{tpu_custom_call.1} parent=1 // pred_fallthru
      _
    // Predicated region
    $region10: #{tpu_custom_call.1} parent=1 // pred_check
      _
    $region11: #{tpu_custom_call.1} parent=1 // pred_check_branch
      %43 = sbr.rel (0) target = $region13
    $region12: #{tpu_custom_call.1} parent=1 // pred_region
      _
    $region13: #{tpu_custom_call.1} parent=1 // pred_fallthru
      _
    // Predicated region
    $region14: #{tpu_custom_call.1} parent=1 // pred_check
      _
    $region15: #{tpu_custom_call.1} parent=1 // pred_check_branch
      %45 = sbr.rel (0) target = $region17
    $region16: #{tpu_custom_call.1} parent=1 // pred_region
      %47 = vsyncadd [#allocation6], 0
      %s48 = sshll.u32 %s3, 4
      %s49 = int_to_ptr.hbm [resolvable:$true] %s48
      %s50 = sshll.u32 [#allocation7], 4
      %s51 = int_to_ptr.vmem [resolvable:$true] %s50
      %56 = dma.hbm_to_vmem [thread:$0]  %s49, 2048, %s51, [#allocation6], 128, 128, 8
    $region17: #{tpu_custom_call.1} parent=1 // pred_fallthru
      _
    // Predicated region
    $region18: #{tpu_custom_call.1} parent=1 // pred_check
      _
    $region19: #{tpu_custom_call.1} parent=1 // pred_check_branch
      %58 = sbr.rel (0) target = $region21
    $region20: #{tpu_custom_call.1} parent=1 // pred_region
      _
    $region21: #{tpu_custom_call.1} parent=1 // pred_fallthru
      _
    // Predicated region
    $region22: #{tpu_custom_call.1} parent=1 // pred_check
      _
    $region23: #{tpu_custom_call.1} parent=1 // pred_check_branch
      %60 = sbr.rel (0) target = $region25
    $region24: #{tpu_custom_call.1} parent=1 // pred_region
      %62 = vsyncadd [#allocation9], 0
      %s63 = sshll.u32 %s5, 4
      %s64 = int_to_ptr.hbm [resolvable:$true] %s63
      %s65 = sshll.u32 [#allocation8], 4
      %s66 = int_to_ptr.vmem [resolvable:$true] %s65
      %71 = dma.hbm_to_vmem [thread:$0]  %s64, 128, %s66, [#allocation9], 64, 64, 4
    $region25: #{tpu_custom_call.1} parent=1 // pred_fallthru
      _
    // Predicated region
    $region26: #{tpu_custom_call.1} parent=1 // pred_check
      _
    $region27: #{tpu_custom_call.1} parent=1 // pred_check_branch
      %73 = sbr.rel (0) target = $region29
    $region28: #{tpu_custom_call.1} parent=1 // pred_region
      %75 = vsyncadd [#allocation9], 0
      %s76 = sshll.u32 %s6, 4
      %s77 = int_to_ptr.hbm [resolvable:$true] %s76
      %s78 = sshll.u32 [#allocation10], 4
      %s79 = int_to_ptr.vmem [resolvable:$true] %s78
      %84 = dma.hbm_to_vmem [thread:$0]  %s77, 128, %s79, [#allocation9], 64, 64, 4
    $region29: #{tpu_custom_call.1} parent=1 // pred_fallthru
      _
    // Predicated region
    $region30: #{tpu_custom_call.1} parent=1 // pred_check
      _
    $region31: #{tpu_custom_call.1} parent=1 // pred_check_branch
      %86 = sbr.rel (0) target = $region33
    $region32: #{tpu_custom_call.1} parent=1 // pred_region
      %88 = dma.done [#allocation3], 128
    $region33: #{tpu_custom_call.1} parent=1 // pred_fallthru
      _
    // Predicated region
    $region34: #{tpu_custom_call.1} parent=1 // pred_check
      _
    $region35: #{tpu_custom_call.1} parent=1 // pred_check_branch
      %90 = sbr.rel (0) target = $region37
    $region36: #{tpu_custom_call.1} parent=1 // pred_region
      %92 = dma.done [#allocation6], 1024
    $region37: #{tpu_custom_call.1} parent=1 // pred_fallthru
      _
    // Predicated region
    $region38: #{tpu_custom_call.1} parent=1 // pred_check
      _
    $region39: #{tpu_custom_call.1} parent=1 // pred_check_branch
      %94 = sbr.rel (0) target = $region41
    $region40: #{tpu_custom_call.1} parent=1 // pred_region
      %96 = dma.done [#allocation6], 2048
    $region41: #{tpu_custom_call.1} parent=1 // pred_fallthru
      _
    // Predicated region
    $region42: #{tpu_custom_call.1} parent=1 // pred_check
      _
    $region43: #{tpu_custom_call.1} parent=1 // pred_check_branch
      %98 = sbr.rel (0) target = $region45
    $region44: #{tpu_custom_call.1} parent=1 // pred_region
      %100 = dma.done [#allocation9], 128
    $region45: #{tpu_custom_call.1} parent=1 // pred_fallthru
      _
    // Predicated region
    $region46: #{tpu_custom_call.1} parent=1 // pred_check
      _
    $region47: #{tpu_custom_call.1} parent=1 // pred_check_branch
      %102 = sbr.rel (0) target = $region49
    $region48: #{tpu_custom_call.1} parent=1 // pred_region
      %104 = dma.done [#allocation9], 128
    $region49: #{tpu_custom_call.1} parent=1 // pred_fallthru
      _
    %v105 = vld [vmem:[#allocation2] sm:$0xf]
    %v106 = vld [vmem:[#allocation2 + $0x4] sm:$0xf]
    %v107 = vld [vmem:[#allocation5] sm:$0xf]
    %v108 = vld [vmem:[#allocation5 + $0x4] sm:$0xf]
    %v109 = vld [vmem:[#allocation5 + $0x8] sm:$0xf]
    %v110 = vld [vmem:[#allocation5 + $0xc] sm:$0xf]
    %v111 = vld [vmem:[#allocation5 + $0x10] sm:$0xf]
    %v112 = vld [vmem:[#allocation5 + $0x14] sm:$0xf]
    %v113 = vld [vmem:[#allocation5 + $0x18] sm:$0xf]
    %v114 = vld [vmem:[#allocation5 + $0x1c] sm:$0xf]
    %v115 = vld [vmem:[#allocation5 + $0x20] sm:$0xf]
    %v116 = vld [vmem:[#allocation5 + $0x24] sm:$0xf]
    %v117 = vld [vmem:[#allocation5 + $0x28] sm:$0xf]
    %v118 = vld [vmem:[#allocation5 + $0x2c] sm:$0xf]
    %v119 = vld [vmem:[#allocation5 + $0x30] sm:$0xf]
    %v120 = vld [vmem:[#allocation5 + $0x34] sm:$0xf]
    %v121 = vld [vmem:[#allocation5 + $0x38] sm:$0xf]
    %v122 = vld [vmem:[#allocation5 + $0x3c] sm:$0xf]
    %v123 = vld [vmem:[%s2] sm:$0x1]
    %v125 = vperm.slane %v123, 0
    %v129 = vunpack.c.l.b16 %v105
    %v130 = vunpack.c.l.b16 %v106
    %v131 = vpack.c.b16 %v130, %v129
    %v149 = vunpack.c.l.b16 %v107
    %v150 = vunpack.c.l.b16 %v108
    %v151 = vunpack.c.l.b16 %v109
    %v152 = vunpack.c.l.b16 %v110
    %v153 = vunpack.c.l.b16 %v111
    %v154 = vunpack.c.l.b16 %v112
    %v155 = vunpack.c.l.b16 %v113
    %v156 = vunpack.c.l.b16 %v114
    %v157 = vunpack.c.l.b16 %v115
    %v158 = vunpack.c.l.b16 %v116
    %v159 = vunpack.c.l.b16 %v117
    %v160 = vunpack.c.l.b16 %v118
    %v161 = vunpack.c.l.b16 %v119
    %v162 = vunpack.c.l.b16 %v120
    %v163 = vunpack.c.l.b16 %v121
    %v164 = vunpack.c.l.b16 %v122
    %v165 = vpack.c.b16 %v150, %v149
    %v166 = vpack.c.b16 %v152, %v151
    %v167 = vpack.c.b16 %v154, %v153
    %v168 = vpack.c.b16 %v156, %v155
    %v169 = vpack.c.b16 %v158, %v157
    %v170 = vpack.c.b16 %v160, %v159
    %v171 = vpack.c.b16 %v162, %v161
    %v172 = vpack.c.b16 %v164, %v163
    %181 = vmatpush.bf16.msra.mxu0 %v172
    %182 = vmatpush.bf16.msra.mxu0 %v171
    %183 = vmatpush.bf16.msra.mxu0 %v170
    %184 = vmatpush.bf16.msra.mxu0 %v169
    %185 = vmatpush.bf16.msra.mxu0 %v168
    %186 = vmatpush.bf16.msra.mxu0 %v167
    %187 = vmatpush.bf16.msra.mxu0 %v166
    %188 = vmatpush.bf16.msra.mxu0 %v165
    %189 = vmatmul.bf16.gmra.mxu0 %v131
    %v190 = vpop.f32.mrf.mxu0
    %v191 = vadd.f32 %v125, %v190
    %v192 = vpop.f32.mrf.mxu0
    %v193 = vadd.f32 %v125, %v192
    %194 = vdwg.mxu0
    %v195 = vmax.f32 %v191, 0.0
    %v196 = vmax.f32 %v193, 0.0
    %v197 = vld [vmem:[#allocation8] sm:$0xf]
    %v198 = vld [vmem:[#allocation8 + $0x4] sm:$0xf]
    %v199 = vunpack.c.l.bf16 %v197
    %v200 = vunpack.c.l.bf16 %v198
    %v201 = vmul.f32 %v195, %v199
    %v202 = vmul.f32 %v196, %v200
    %v203 = vpack.c.bf16 %v202, %v201
    %v204 = vld [vmem:[#allocation7] sm:$0xff]
    %v205 = vld [vmem:[#allocation7 + $0x8] sm:$0xff]
    %v206 = vld [vmem:[#allocation7 + $0x10] sm:$0xff]
    %v207 = vld [vmem:[#allocation7 + $0x18] sm:$0xff]
    %v208 = vld [vmem:[#allocation7 + $0x20] sm:$0xff]
    %v209 = vld [vmem:[#allocation7 + $0x28] sm:$0xff]
    %v210 = vld [vmem:[#allocation7 + $0x30] sm:$0xff]
    %v211 = vld [vmem:[#allocation7 + $0x38] sm:$0xff]
    %v212 = vld [vmem:[#allocation7 + $0x40] sm:$0xff]
    %v213 = vld [vmem:[#allocation7 + $0x48] sm:$0xff]
    %v214 = vld [vmem:[#allocation7 + $0x50] sm:$0xff]
    %v215 = vld [vmem:[#allocation7 + $0x58] sm:$0xff]
    %v216 = vld [vmem:[#allocation7 + $0x60] sm:$0xff]
    %v217 = vld [vmem:[#allocation7 + $0x68] sm:$0xff]
    %v218 = vld [vmem:[#allocation7 + $0x70] sm:$0xff]
    %v219 = vld [vmem:[#allocation7 + $0x78] sm:$0xff]
    %v220 = vld [vmem:[%s4] sm:$0x3]
    %v222 = vperm.slane %v220, 0
    %v223 = vperm.slane %v220, 1
    %v242 = vunpack.c.l.b16 %v204
    %v243 = vunpack.c.h.b16 %v204
    %v244 = vunpack.c.l.b16 %v205
    %v245 = vunpack.c.h.b16 %v205
    %v246 = vunpack.c.l.b16 %v206
    %v247 = vunpack.c.h.b16 %v206
    %v248 = vunpack.c.l.b16 %v207
    %v249 = vunpack.c.h.b16 %v207
    %v250 = vunpack.c.l.b16 %v208
    %v251 = vunpack.c.h.b16 %v208
    %v252 = vunpack.c.l.b16 %v209
    %v253 = vunpack.c.h.b16 %v209
    %v254 = vunpack.c.l.b16 %v210
    %v255 = vunpack.c.h.b16 %v210
    %v256 = vunpack.c.l.b16 %v211
    %v257 = vunpack.c.h.b16 %v211
    %v258 = vunpack.c.l.b16 %v212
    %v259 = vunpack.c.h.b16 %v212
    %v260 = vunpack.c.l.b16 %v213
    %v261 = vunpack.c.h.b16 %v213
    %v262 = vunpack.c.l.b16 %v214
    %v263 = vunpack.c.h.b16 %v214
    %v264 = vunpack.c.l.b16 %v215
    %v265 = vunpack.c.h.b16 %v215
    %v266 = vunpack.c.l.b16 %v216
    %v267 = vunpack.c.h.b16 %v216
    %v268 = vunpack.c.l.b16 %v217
    %v269 = vunpack.c.h.b16 %v217
    %v270 = vunpack.c.l.b16 %v218
    %v271 = vunpack.c.h.b16 %v218
    %v272 = vunpack.c.l.b16 %v219
    %v273 = vunpack.c.h.b16 %v219
    %v274 = vpack.c.b16 %v244, %v242
    %v275 = vpack.c.b16 %v245, %v243
    %v276 = vpack.c.b16 %v248, %v246
    %v277 = vpack.c.b16 %v249, %v247
    %v278 = vpack.c.b16 %v252, %v250
    %v279 = vpack.c.b16 %v253, %v251
    %v280 = vpack.c.b16 %v256, %v254
    %v281 = vpack.c.b16 %v257, %v255
    %v282 = vpack.c.b16 %v260, %v258
    %v283 = vpack.c.b16 %v261, %v259
    %v284 = vpack.c.b16 %v264, %v262
    %v285 = vpack.c.b16 %v265, %v263
    %v286 = vpack.c.b16 %v268, %v266
    %v287 = vpack.c.b16 %v269, %v267
    %v288 = vpack.c.b16 %v272, %v270
    %v289 = vpack.c.b16 %v273, %v271
    %306 = vmatpush.bf16.msra.mxu0 %v288
    %307 = vmatpush.bf16.msra.mxu0 %v286
    %308 = vmatpush.bf16.msra.mxu0 %v284
    %309 = vmatpush.bf16.msra.mxu0 %v282
    %310 = vmatpush.bf16.msra.mxu0 %v280
    %311 = vmatpush.bf16.msra.mxu0 %v278
    %312 = vmatpush.bf16.msra.mxu0 %v276
    %313 = vmatpush.bf16.msra.mxu0 %v274
    %314 = vmatmul.bf16.gmra.mxu0 %v203
    %v315 = vpop.f32.mrf.mxu0
    %v316 = vadd.f32 %v222, %v315
    %v317 = vpop.f32.mrf.mxu0
    %v318 = vadd.f32 %v222, %v317
    %319 = vdwg.mxu0
    %320 = vmatpush.bf16.msra.mxu0 %v289
    %321 = vmatpush.bf16.msra.mxu0 %v287
    %322 = vmatpush.bf16.msra.mxu0 %v285
    %323 = vmatpush.bf16.msra.mxu0 %v283
    %324 = vmatpush.bf16.msra.mxu0 %v281
    %325 = vmatpush.bf16.msra.mxu0 %v279
    %326 = vmatpush.bf16.msra.mxu0 %v277
    %327 = vmatpush.bf16.msra.mxu0 %v275
    %328 = vmatmul.bf16.gmra.mxu0 %v203
    %v329 = vpop.f32.mrf.mxu0
    %v330 = vadd.f32 %v223, %v329
    %v331 = vpop.f32.mrf.mxu0
    %v332 = vadd.f32 %v223, %v331
    %333 = vdwg.mxu0
    %v334 = vld [vmem:[#allocation10] sm:$0xf]
    %v335 = vld [vmem:[#allocation10 + $0x4] sm:$0xf]
    %v336 = vunpack.c.l.bf16 %v334
    %v337 = vunpack.c.l.bf16 %v335
    %v338 = vmul.f32 %v330, 0.5
    %v339 = vmul.f32 %v332, 0.5
    %v340 = vmul.f32 %v338, 1.442695
    %v341 = vpow.pop %v340
    %v342 = vmul.f32 %v339, 1.442695
    %v343 = vpow.pop %v342
    %v344 = vmul.f32 %v336, %v341
    %v345 = vmul.f32 %v337, %v343
    %v346 = vadd.f32 %v344, %v316
    %v347 = vadd.f32 %v345, %v318
    %348 = vst [vmem:[#allocation11] sm:$0xff] %v346
    %349 = vst [vmem:[#allocation11 + $0x8] sm:$0xff] %v347
    // Predicated region
    $region50: #{tpu_custom_call.1} parent=1 // pred_check
      _
    $region51: #{tpu_custom_call.1} parent=1 // pred_check_branch
      %351 = sbr.rel (0) target = $region53
    $region52: #{tpu_custom_call.1} parent=1 // pred_region
      %353 = vsyncadd [#allocation4], 0
      %s354 = sshll.u32 [#allocation11], 4
      %s355 = int_to_ptr.vmem [resolvable:$true] %s354
      %s356 = sshll.u32 %s7, 4
      %s357 = int_to_ptr.hbm [resolvable:$true] %s356
      %362 = dma.vmem_to_hbm [thread:$0]  %s355, 256, %s357, [#allocation4], 128, 128, 8
    $region53: #{tpu_custom_call.1} parent=1 // pred_fallthru
      _
    // Predicated region
    $region54: #{tpu_custom_call.1} parent=1 // pred_check
      _
    $region55: #{tpu_custom_call.1} parent=1 // pred_check_branch
      %364 = sbr.rel (0) target = $region57
    $region56: #{tpu_custom_call.1} parent=1 // pred_region
      %366 = dma.done [#allocation4], 256
    $region57: #{tpu_custom_call.1} parent=1 // pred_fallthru
      _
    %367 = vsyncpa [#allocation3], 1
    %368 = vsyncpa [#allocation6], 1
    %369 = vsyncpa [#allocation9], 1
    %370 = vsyncpa [#allocation4], 1

</llo_original>
